<compile_context>
chip_gen: v7x
topology: tpu7x:2x2x1
jax: 0.10.0
libtpu: 0.0.40
codegen_flags: <defaults>
</compile_context>

<pallas_src>
import functools

import jax
import jax.numpy as jnp
from jax.experimental import pallas as pl
from jax.experimental.pallas import tpu as pltpu


def _round_up(n, m):
    return ((n + m - 1) // m) * m


def _softplus(x):
    # PyTorch nn.Softplus(beta=1, threshold=20): x if x > 20 else log1p(exp(x))
    return jnp.where(x > 20.0, x, jnp.log1p(jnp.exp(jnp.minimum(x, 20.0))))


def _batchnorm_train(x, gamma, beta, eps):
    # nn.BatchNorm1d training mode: biased batch statistics over the batch axis.
    mu = jnp.mean(x, axis=0, keepdims=True)
    d = x - mu
    var = jnp.mean(d * d, axis=0, keepdims=True)
    return d * jax.lax.rsqrt(var + eps) * gamma + beta


def reconv_kernel(a1_ref, a2_ref, w_ref, p_ref, o1_ref, o2_ref, *, fp, eps):
    """Both branches in one invocation.

    a1_ref, a2_ref: (B, Fp) f32, lane-dense padded atoms
    w_ref:          (Fp, 4*Fp) bf16 packed weight
                    cols [0:2Fp)   = W_own   (filter half | core half)
                    cols [2Fp:4Fp) = W_other (filter half | core half)
    p_ref:          (8, 2*Fp) f32 packed params
                    rows = [bias, bn1_gamma, bn1_beta, bn2_gamma, bn2_beta, 0, 0, 0]
    o1_ref, o2_ref: (B, Fp) f32 per-branch outputs
    """
    a1 = a1_ref[...]                                     # (B, Fp) f32
    a2 = a2_ref[...]
    w = w_ref[...]                                       # (Fp, 4Fp) bf16
    p = p_ref[...]                                       # (8, 2Fp) f32

    bias, bn1_g, bn1_b = p[0:1, :], p[1:2, :], p[2:3, :]  # (1, 2Fp)
    bn2_g, bn2_b = p[3:4, :fp], p[4:5, :fp]               # (1, Fp)

    # Two bf16 MXU calls, f32 accumulation.
    #   p1[:, :2Fp] = a1 @ W_own,  p1[:, 2Fp:] = a1 @ W_other   (same for p2/a2)
    p1 = jnp.dot(a1.astype(jnp.bfloat16), w, preferred_element_type=jnp.float32)
    p2 = jnp.dot(a2.astype(jnp.bfloat16), w, preferred_element_type=jnp.float32)

    def branch(x, own, other, o_ref):
        # g = cat(x, y) @ W^T + b, with this branch's atom first.
        g = own[:, :2 * fp] + other[:, 2 * fp:] + bias
        g = _batchnorm_train(g, bn1_g, bn1_b, eps)       # bn1, per-branch batch stats
        filt = jax.nn.sigmoid(g[:, :fp])                  # filter half (lane-aligned)
        core = _softplus(g[:, fp:])                       # core half
        s = _batchnorm_train(filt * core, bn2_g, bn2_b, eps)  # bn2
        o_ref[...] = _softplus(x + s)                     # residual + softplus

    branch(a1, p1, p2, o1_ref)                            # atom1-first branch
    branch(a2, p2, p1, o2_ref)                            # atom2-first branch


def prepare_params(params, feature_len):
    """One-time prep: transpose, pad to lane-dense Fp, pack, cast weight to bf16.

    Output columns are remapped so the filter half occupies cols [0:Fp) and the
    core half cols [Fp:2*Fp); real data sits in the first F columns of each
    half, padding columns carry zero weight / zero gamma (so they stay zero
    through BN and never leak into real columns).
    """
    F = feature_len
    Fp = _round_up(F, 128)

    wt = jnp.asarray(params["fc_w"], jnp.float32).T      # (2F_in, 2F_out)

    def place_cols(block):                               # (F, 2F) -> (F, 2*Fp)
        out = jnp.zeros((F, 2 * Fp), jnp.float32)
        out = out.at[:, :F].set(block[:, :F])            # filter half
        out = out.at[:, Fp:Fp + F].set(block[:, F:])     # core half
        return out

    # Packed weight (Fp, 4*Fp): K is a single atom's Fp; the two 2*Fp column
    # groups correspond to "this atom is the first / second input of the cat".
    w_pack = jnp.zeros((Fp, 4 * Fp), jnp.float32)
    w_pack = w_pack.at[:F, :2 * Fp].set(place_cols(wt[:F]))    # rows hit by own atom
    w_pack = w_pack.at[:F, 2 * Fp:].set(place_cols(wt[F:]))    # rows hit by other atom

    def place_row(vec2f):                                # (2F,) -> (2*Fp,)
        r = jnp.zeros((2 * Fp,), jnp.float32)
        r = r.at[:F].set(vec2f[:F])
        r = r.at[Fp:Fp + F].set(vec2f[F:])
        return r

    packed = jnp.zeros((8, 2 * Fp), jnp.float32)
    packed = packed.at[0].set(place_row(jnp.asarray(params["fc_b"], jnp.float32)))
    packed = packed.at[1].set(place_row(jnp.asarray(params["bn1_gamma"], jnp.float32)))
    packed = packed.at[2].set(place_row(jnp.asarray(params["bn1_beta"], jnp.float32)))
    packed = packed.at[3, :F].set(jnp.asarray(params["bn2_gamma"], jnp.float32))
    packed = packed.at[4, :F].set(jnp.asarray(params["bn2_beta"], jnp.float32))

    return {"w": w_pack.astype(jnp.bfloat16),            # bf16 MXU operand
            "p": packed, "feature_len": F, "fp": Fp}


def _vmem_estimate_bytes(B, Fp):
    f32, bf16 = 4, 2
    w = Fp * 4 * Fp * bf16                       # packed bf16 weight
    acts = 2 * B * Fp * f32                      # a1, a2
    prm = 8 * 2 * Fp * f32                       # packed params
    outs = 2 * B * Fp * f32                      # o1, o2
    tmps = 2 * B * 4 * Fp * f32 + 8 * B * 2 * Fp * f32   # p1/p2 + BN/activation temps
    return w + acts + prm + outs + tmps + (2 << 20)       # + slack


def _physical_vmem_bytes():
    try:
        return int(pltpu.get_tpu_info().vmem_capacity_bytes)
    except Exception:
        return 64 << 20   # conservative: v7x per-TensorCore VMEM


def reconv_layer(atom1, atom2, prep, *, eps=1e-5):
    """Pallas implementation of ReConvLayer.forward (training-mode batchnorm)."""
    B, F = atom1.shape
    assert prep["feature_len"] == F
    Fp = prep["fp"]

    # Lane-dense padding only — no duplication, no branch-concatenated lhs.
    pad = ((0, 0), (0, Fp - F))
    a1p = jnp.pad(atom1.astype(jnp.float32), pad)
    a2p = jnp.pad(atom2.astype(jnp.float32), pad)

    kernel = functools.partial(reconv_kernel, fp=Fp, eps=eps)
    vmem = pl.BlockSpec(memory_space=pltpu.MemorySpace.VMEM)

    cp_kwargs = {}
    est = _vmem_estimate_bytes(B, Fp)
    # v5e's default scoped VMEM is 16 MiB (v6e/v7x: 32 MiB); raise the limit
    # whenever the estimate approaches that, capped below physical VMEM.
    if est > (14 << 20):
        cap = _physical_vmem_bytes()
        cp_kwargs["vmem_limit_bytes"] = min(est, (cap * 3) // 4)

    out1, out2 = pl.pallas_call(
        kernel,
        out_shape=(jax.ShapeDtypeStruct((B, Fp), jnp.float32),
                   jax.ShapeDtypeStruct((B, Fp), jnp.float32)),
        # Single invocation (no grid): every operand is a full-array VMEM block,
        # single-buffered — no double-buffer copies of the grid-invariant weight.
        in_specs=[vmem, vmem, vmem, vmem],
        out_specs=(vmem, vmem),
        compiler_params=pltpu.CompilerParams(**cp_kwargs),
    )(a1p, a2p, prep["w"], prep["p"])

    return out1[:, :F], out2[:, :F]


def init_params(key, feature_len):
    """Deterministic init matching nn.Linear / nn.BatchNorm1d defaults."""
    insize = 2 * feature_len
    out = 2 * feature_len
    kw, kb = jax.random.split(key)
    bound = 1.0 / jnp.sqrt(insize)
    return {
        "fc_w": jax.random.uniform(kw, (out, insize), jnp.float32, -bound, bound),
        "fc_b": jax.random.uniform(kb, (out,), jnp.float32, -bound, bound),
        "bn1_gamma": jnp.ones((out,), jnp.float32),
        "bn1_beta": jnp.zeros((out,), jnp.float32),
        "bn2_gamma": jnp.ones((feature_len,), jnp.float32),
        "bn2_beta": jnp.zeros((feature_len,), jnp.float32),
    }


def _reference(atom1, atom2, params, eps=1e-5):
    """Pure-JAX f32 reference of the PyTorch forward (training-mode BN)."""
    wt = params["fc_w"].T
    b = params["fc_b"]

    def branch(x, y):
        g = jnp.concatenate([x, y], axis=1) @ wt + b
        g = _batchnorm_train(g, params["bn1_gamma"], params["bn1_beta"], eps)
        F = x.shape[1]
        filt = jax.nn.sigmoid(g[:, :F])
        core = _softplus(g[:, F:])
        s = _batchnorm_train(filt * core, params["bn2_gamma"], params["bn2_beta"], eps)
        return _softplus(x + s)

    return branch(atom1, atom2), branch(atom2, atom1)


if __name__ == "__main__":
    B, F = 8, 32
    key = jax.random.PRNGKey(0)
    k1, k2, kp = jax.random.split(key, 3)
    atom1 = jax.random.normal(k1, (B, F), jnp.float32)
    atom2 = jax.random.normal(k2, (B, F), jnp.float32)
    params = init_params(kp, F)
    prep = prepare_params(params, F)            # one-time, out of the hot path

    out1, out2 = reconv_layer(atom1, atom2, prep)
    jax.block_until_ready((out1, out2))
    assert out1.shape == (B, F) and out2.shape == (B, F)
    assert bool(jnp.all(jnp.isfinite(out1))) and bool(jnp.all(jnp.isfinite(out2)))

    # Reference is full f32; the kernel uses bf16 matmul operands with f32
    # accumulation (BN/activations in f32), so allow a slightly looser tolerance.
    ref1, ref2 = _reference(atom1, atom2, params)
    assert bool(jnp.allclose(out1, ref1, rtol=2e-2, atol=2e-2))
    assert bool(jnp.allclose(out2, ref2, rtol=2e-2, atol=2e-2))

    print("KERNEL_OK")
</pallas_src>

<mosaic_0001>
module attributes {stable_mosaic.version = 11 : i64} {
  func.func @reconv_kernel(%arg0: memref<8x128xf32, #tpu.memory_space<vmem>>, %arg1: memref<8x128xf32, #tpu.memory_space<vmem>>, %arg2: memref<128x512xbf16, #tpu.memory_space<vmem>>, %arg3: memref<8x256xf32, #tpu.memory_space<vmem>>, %arg4: memref<8x128xf32, #tpu.memory_space<vmem>>, %arg5: memref<8x128xf32, #tpu.memory_space<vmem>>) attributes {dimension_semantics = [], scalar_prefetch = 0 : i64, scratch_operands = 0 : i64, tpu.core_type = #tpu.core_type<tc>} {
    %c0 = arith.constant 0 : index
    %c0_0 = arith.constant 0 : index
    %0 = vector.load %arg0[%c0, %c0_0] : memref<8x128xf32, #tpu.memory_space<vmem>>, vector<8x128xf32>
    %c0_1 = arith.constant 0 : index
    %c0_2 = arith.constant 0 : index
    %1 = vector.load %arg1[%c0_1, %c0_2] : memref<8x128xf32, #tpu.memory_space<vmem>>, vector<8x128xf32>
    %c0_3 = arith.constant 0 : index
    %c0_4 = arith.constant 0 : index
    %2 = vector.load %arg2[%c0_3, %c0_4] : memref<128x512xbf16, #tpu.memory_space<vmem>>, vector<128x512xbf16>
    %c0_5 = arith.constant 0 : index
    %c0_6 = arith.constant 0 : index
    %3 = vector.load %arg3[%c0_5, %c0_6] : memref<8x256xf32, #tpu.memory_space<vmem>>, vector<8x256xf32>
    %4 = vector.extract_strided_slice %3 {offsets = [0, 0], sizes = [1, 256], strides = [1, 1]} : vector<8x256xf32> to vector<1x256xf32>
    %5 = vector.extract_strided_slice %3 {offsets = [1, 0], sizes = [1, 256], strides = [1, 1]} : vector<8x256xf32> to vector<1x256xf32>
    %6 = vector.extract_strided_slice %3 {offsets = [2, 0], sizes = [1, 256], strides = [1, 1]} : vector<8x256xf32> to vector<1x256xf32>
    %7 = vector.extract_strided_slice %3 {offsets = [3, 0], sizes = [1, 128], strides = [1, 1]} : vector<8x256xf32> to vector<1x128xf32>
    %8 = vector.extract_strided_slice %3 {offsets = [4, 0], sizes = [1, 128], strides = [1, 1]} : vector<8x256xf32> to vector<1x128xf32>
    %9 = arith.truncf %0 : vector<8x128xf32> to vector<8x128xbf16>
    %cst = arith.constant dense<0.000000e+00> : vector<8x512xf32>
    %10 = tpu.matmul %9, %2, %cst {dimension_numbers = #tpu.dot_dimension_numbers<[1], [0], [0], [1], [0, 0, 1, 1], [], []>} : vector<8x128xbf16>, vector<128x512xbf16>, vector<8x512xf32> -> vector<8x512xf32>
    %11 = arith.truncf %1 : vector<8x128xf32> to vector<8x128xbf16>
    %cst_7 = arith.constant dense<0.000000e+00> : vector<8x512xf32>
    %12 = tpu.matmul %11, %2, %cst_7 {dimension_numbers = #tpu.dot_dimension_numbers<[1], [0], [0], [1], [0, 0, 1, 1], [], []>} : vector<8x128xbf16>, vector<128x512xbf16>, vector<8x512xf32> -> vector<8x512xf32>
    %13 = vector.extract_strided_slice %10 {offsets = [0, 0], sizes = [8, 256], strides = [1, 1]} : vector<8x512xf32> to vector<8x256xf32>
    %14 = vector.extract_strided_slice %12 {offsets = [0, 256], sizes = [8, 256], strides = [1, 1]} : vector<8x512xf32> to vector<8x256xf32>
    %15 = arith.addf %13, %14 : vector<8x256xf32>
    %16 = vector.broadcast %4 : vector<1x256xf32> to vector<8x256xf32>
    %17 = arith.addf %15, %16 : vector<8x256xf32>
    %cst_8 = arith.constant dense<0.000000e+00> : vector<256xf32>
    %18 = vector.multi_reduction <add>, %17, %cst_8 [0] : vector<8x256xf32> to vector<256xf32>
    %19 = vector.shape_cast %18 : vector<256xf32> to vector<1x256xf32>
    %cst_9 = arith.constant 8.000000e+00 : f32
    %20 = vector.broadcast %cst_9 : f32 to vector<1x256xf32>
    %21 = arith.divf %19, %20 : vector<1x256xf32>
    %22 = vector.broadcast %21 : vector<1x256xf32> to vector<8x256xf32>
    %23 = arith.subf %17, %22 : vector<8x256xf32>
    %24 = arith.mulf %23, %23 : vector<8x256xf32>
    %cst_10 = arith.constant dense<0.000000e+00> : vector<256xf32>
    %25 = vector.multi_reduction <add>, %24, %cst_10 [0] : vector<8x256xf32> to vector<256xf32>
    %26 = vector.shape_cast %25 : vector<256xf32> to vector<1x256xf32>
    %cst_11 = arith.constant 8.000000e+00 : f32
    %27 = vector.broadcast %cst_11 : f32 to vector<1x256xf32>
    %28 = arith.divf %26, %27 : vector<1x256xf32>
    %cst_12 = arith.constant 9.99999974E-6 : f32
    %29 = vector.broadcast %cst_12 : f32 to vector<1x256xf32>
    %30 = arith.addf %28, %29 : vector<1x256xf32>
    %31 = math.rsqrt %30 : vector<1x256xf32>
    %32 = vector.broadcast %31 : vector<1x256xf32> to vector<8x256xf32>
    %33 = arith.mulf %23, %32 : vector<8x256xf32>
    %34 = vector.broadcast %5 : vector<1x256xf32> to vector<8x256xf32>
    %35 = arith.mulf %33, %34 : vector<8x256xf32>
    %36 = vector.broadcast %6 : vector<1x256xf32> to vector<8x256xf32>
    %37 = arith.addf %35, %36 : vector<8x256xf32>
    %38 = vector.extract_strided_slice %37 {offsets = [0, 0], sizes = [8, 128], strides = [1, 1]} : vector<8x256xf32> to vector<8x128xf32>
    %39 = arith.negf %38 : vector<8x128xf32>
    %40 = math.exp %39 : vector<8x128xf32>
    %cst_13 = arith.constant 1.000000e+00 : f32
    %41 = vector.broadcast %cst_13 : f32 to vector<8x128xf32>
    %42 = arith.addf %41, %40 : vector<8x128xf32>
    %43 = arith.divf %41, %42 : vector<8x128xf32>
    %44 = vector.extract_strided_slice %37 {offsets = [0, 128], sizes = [8, 128], strides = [1, 1]} : vector<8x256xf32> to vector<8x128xf32>
    %cst_14 = arith.constant 2.000000e+01 : f32
    %45 = vector.broadcast %cst_14 : f32 to vector<8x128xf32>
    %46 = arith.cmpf ogt, %44, %45 : vector<8x128xf32>
    %cst_15 = arith.constant 2.000000e+01 : f32
    %47 = vector.broadcast %cst_15 : f32 to vector<8x128xf32>
    %48 = arith.minimumf %44, %47 : vector<8x128xf32>
    %49 = math.exp %48 : vector<8x128xf32>
    %50 = math.log1p %49 : vector<8x128xf32>
    %51 = arith.select %46, %44, %50 : vector<8x128xi1>, vector<8x128xf32>
    %52 = arith.mulf %43, %51 : vector<8x128xf32>
    %cst_16 = arith.constant dense<0.000000e+00> : vector<128xf32>
    %53 = vector.multi_reduction <add>, %52, %cst_16 [0] : vector<8x128xf32> to vector<128xf32>
    %54 = vector.shape_cast %53 : vector<128xf32> to vector<1x128xf32>
    %cst_17 = arith.constant 8.000000e+00 : f32
    %55 = vector.broadcast %cst_17 : f32 to vector<1x128xf32>
    %56 = arith.divf %54, %55 : vector<1x128xf32>
    %57 = vector.broadcast %56 : vector<1x128xf32> to vector<8x128xf32>
    %58 = arith.subf %52, %57 : vector<8x128xf32>
    %59 = arith.mulf %58, %58 : vector<8x128xf32>
    %cst_18 = arith.constant dense<0.000000e+00> : vector<128xf32>
    %60 = vector.multi_reduction <add>, %59, %cst_18 [0] : vector<8x128xf32> to vector<128xf32>
    %61 = vector.shape_cast %60 : vector<128xf32> to vector<1x128xf32>
    %cst_19 = arith.constant 8.000000e+00 : f32
    %62 = vector.broadcast %cst_19 : f32 to vector<1x128xf32>
    %63 = arith.divf %61, %62 : vector<1x128xf32>
    %cst_20 = arith.constant 9.99999974E-6 : f32
    %64 = vector.broadcast %cst_20 : f32 to vector<1x128xf32>
    %65 = arith.addf %63, %64 : vector<1x128xf32>
    %66 = math.rsqrt %65 : vector<1x128xf32>
    %67 = vector.broadcast %66 : vector<1x128xf32> to vector<8x128xf32>
    %68 = arith.mulf %58, %67 : vector<8x128xf32>
    %69 = vector.broadcast %7 : vector<1x128xf32> to vector<8x128xf32>
    %70 = arith.mulf %68, %69 : vector<8x128xf32>
    %71 = vector.broadcast %8 : vector<1x128xf32> to vector<8x128xf32>
    %72 = arith.addf %70, %71 : vector<8x128xf32>
    %73 = arith.addf %0, %72 : vector<8x128xf32>
    %cst_21 = arith.constant 2.000000e+01 : f32
    %74 = vector.broadcast %cst_21 : f32 to vector<8x128xf32>
    %75 = arith.cmpf ogt, %73, %74 : vector<8x128xf32>
    %cst_22 = arith.constant 2.000000e+01 : f32
    %76 = vector.broadcast %cst_22 : f32 to vector<8x128xf32>
    %77 = arith.minimumf %73, %76 : vector<8x128xf32>
    %78 = math.exp %77 : vector<8x128xf32>
    %79 = math.log1p %78 : vector<8x128xf32>
    %80 = arith.select %75, %73, %79 : vector<8x128xi1>, vector<8x128xf32>
    %c0_23 = arith.constant 0 : index
    %c0_24 = arith.constant 0 : index
    %81 = vector.load %arg4[%c0_23, %c0_24] : memref<8x128xf32, #tpu.memory_space<vmem>>, vector<8x128xf32>
    tpu.vector_store %arg4[%c0_23, %c0_24], %80 {strides = array<i32>} : memref<8x128xf32, #tpu.memory_space<vmem>>, vector<8x128xf32>,
    %82 = vector.extract_strided_slice %12 {offsets = [0, 0], sizes = [8, 256], strides = [1, 1]} : vector<8x512xf32> to vector<8x256xf32>
    %83 = vector.extract_strided_slice %10 {offsets = [0, 256], sizes = [8, 256], strides = [1, 1]} : vector<8x512xf32> to vector<8x256xf32>
    %84 = arith.addf %82, %83 : vector<8x256xf32>
    %85 = vector.broadcast %4 : vector<1x256xf32> to vector<8x256xf32>
    %86 = arith.addf %84, %85 : vector<8x256xf32>
    %cst_25 = arith.constant dense<0.000000e+00> : vector<256xf32>
    %87 = vector.multi_reduction <add>, %86, %cst_25 [0] : vector<8x256xf32> to vector<256xf32>
    %88 = vector.shape_cast %87 : vector<256xf32> to vector<1x256xf32>
    %cst_26 = arith.constant 8.000000e+00 : f32
    %89 = vector.broadcast %cst_26 : f32 to vector<1x256xf32>
    %90 = arith.divf %88, %89 : vector<1x256xf32>
    %91 = vector.broadcast %90 : vector<1x256xf32> to vector<8x256xf32>
    %92 = arith.subf %86, %91 : vector<8x256xf32>
    %93 = arith.mulf %92, %92 : vector<8x256xf32>
    %cst_27 = arith.constant dense<0.000000e+00> : vector<256xf32>
    %94 = vector.multi_reduction <add>, %93, %cst_27 [0] : vector<8x256xf32> to vector<256xf32>
    %95 = vector.shape_cast %94 : vector<256xf32> to vector<1x256xf32>
    %cst_28 = arith.constant 8.000000e+00 : f32
    %96 = vector.broadcast %cst_28 : f32 to vector<1x256xf32>
    %97 = arith.divf %95, %96 : vector<1x256xf32>
    %cst_29 = arith.constant 9.99999974E-6 : f32
    %98 = vector.broadcast %cst_29 : f32 to vector<1x256xf32>
    %99 = arith.addf %97, %98 : vector<1x256xf32>
    %100 = math.rsqrt %99 : vector<1x256xf32>
    %101 = vector.broadcast %100 : vector<1x256xf32> to vector<8x256xf32>
    %102 = arith.mulf %92, %101 : vector<8x256xf32>
    %103 = vector.broadcast %5 : vector<1x256xf32> to vector<8x256xf32>
    %104 = arith.mulf %102, %103 : vector<8x256xf32>
    %105 = vector.broadcast %6 : vector<1x256xf32> to vector<8x256xf32>
    %106 = arith.addf %104, %105 : vector<8x256xf32>
    %107 = vector.extract_strided_slice %106 {offsets = [0, 0], sizes = [8, 128], strides = [1, 1]} : vector<8x256xf32> to vector<8x128xf32>
    %108 = arith.negf %107 : vector<8x128xf32>
    %109 = math.exp %108 : vector<8x128xf32>
    %cst_30 = arith.constant 1.000000e+00 : f32
    %110 = vector.broadcast %cst_30 : f32 to vector<8x128xf32>
    %111 = arith.addf %110, %109 : vector<8x128xf32>
    %112 = arith.divf %110, %111 : vector<8x128xf32>
    %113 = vector.extract_strided_slice %106 {offsets = [0, 128], sizes = [8, 128], strides = [1, 1]} : vector<8x256xf32> to vector<8x128xf32>
    %cst_31 = arith.constant 2.000000e+01 : f32
    %114 = vector.broadcast %cst_31 : f32 to vector<8x128xf32>
    %115 = arith.cmpf ogt, %113, %114 : vector<8x128xf32>
    %cst_32 = arith.constant 2.000000e+01 : f32
    %116 = vector.broadcast %cst_32 : f32 to vector<8x128xf32>
    %117 = arith.minimumf %113, %116 : vector<8x128xf32>
    %118 = math.exp %117 : vector<8x128xf32>
    %119 = math.log1p %118 : vector<8x128xf32>
    %120 = arith.select %115, %113, %119 : vector<8x128xi1>, vector<8x128xf32>
    %121 = arith.mulf %112, %120 : vector<8x128xf32>
    %cst_33 = arith.constant dense<0.000000e+00> : vector<128xf32>
    %122 = vector.multi_reduction <add>, %121, %cst_33 [0] : vector<8x128xf32> to vector<128xf32>
    %123 = vector.shape_cast %122 : vector<128xf32> to vector<1x128xf32>
    %cst_34 = arith.constant 8.000000e+00 : f32
    %124 = vector.broadcast %cst_34 : f32 to vector<1x128xf32>
    %125 = arith.divf %123, %124 : vector<1x128xf32>
    %126 = vector.broadcast %125 : vector<1x128xf32> to vector<8x128xf32>
    %127 = arith.subf %121, %126 : vector<8x128xf32>
    %128 = arith.mulf %127, %127 : vector<8x128xf32>
    %cst_35 = arith.constant dense<0.000000e+00> : vector<128xf32>
    %129 = vector.multi_reduction <add>, %128, %cst_35 [0] : vector<8x128xf32> to vector<128xf32>
    %130 = vector.shape_cast %129 : vector<128xf32> to vector<1x128xf32>
    %cst_36 = arith.constant 8.000000e+00 : f32
    %131 = vector.broadcast %cst_36 : f32 to vector<1x128xf32>
    %132 = arith.divf %130, %131 : vector<1x128xf32>
    %cst_37 = arith.constant 9.99999974E-6 : f32
    %133 = vector.broadcast %cst_37 : f32 to vector<1x128xf32>
    %134 = arith.addf %132, %133 : vector<1x128xf32>
    %135 = math.rsqrt %134 : vector<1x128xf32>
    %136 = vector.broadcast %135 : vector<1x128xf32> to vector<8x128xf32>
    %137 = arith.mulf %127, %136 : vector<8x128xf32>
    %138 = vector.broadcast %7 : vector<1x128xf32> to vector<8x128xf32>
    %139 = arith.mulf %137, %138 : vector<8x128xf32>
    %140 = vector.broadcast %8 : vector<1x128xf32> to vector<8x128xf32>
    %141 = arith.addf %139, %140 : vector<8x128xf32>
    %142 = arith.addf %1, %141 : vector<8x128xf32>
    %cst_38 = arith.constant 2.000000e+01 : f32
    %143 = vector.broadcast %cst_38 : f32 to vector<8x128xf32>
    %144 = arith.cmpf ogt, %142, %143 : vector<8x128xf32>
    %cst_39 = arith.constant 2.000000e+01 : f32
    %145 = vector.broadcast %cst_39 : f32 to vector<8x128xf32>
    %146 = arith.minimumf %142, %145 : vector<8x128xf32>
    %147 = math.exp %146 : vector<8x128xf32>
    %148 = math.log1p %147 : vector<8x128xf32>
    %149 = arith.select %144, %142, %148 : vector<8x128xi1>, vector<8x128xf32>
    %c0_40 = arith.constant 0 : index
    %c0_41 = arith.constant 0 : index
    %150 = vector.load %arg5[%c0_40, %c0_41] : memref<8x128xf32, #tpu.memory_space<vmem>>, vector<8x128xf32>
    tpu.vector_store %arg5[%c0_40, %c0_41], %149 {strides = array<i32>} : memref<8x128xf32, #tpu.memory_space<vmem>>, vector<8x128xf32>,
    return
  }
}

</mosaic_0001>

<llo_original>
// kernel: tpu_custom_call.1
$region0: #{tpu_custom_call.1}
  #allocation0 [shape = 'u32[]', space=smem, size = 0x4, offset = 0x4, fixed_abs, tag = 'smem constant byte address 0x4 - core index']
  #allocation1 [shape = 'u32[144,128]{1,0:T(1,128)}', space=vmem, size = 0x12000, scoped, tag = 'internal scratch']
  %s0 = inlined_call_operand.hbm [shape: f32[8,128], index: 0, kind: input, shape index: {}]
  %s1 = inlined_call_operand.hbm [shape: f32[8,128], index: 1, kind: input, shape index: {}]
  %s2 = inlined_call_operand.hbm [shape: bf16[128,512], index: 2, kind: input, shape index: {}]
  %s3 = inlined_call_operand.hbm [shape: f32[8,256], index: 3, kind: input, shape index: {}]
  %s4 = inlined_call_operand.hbm [shape: f32[8,128], index: 4, kind: output, shape index: {0}]
  %s5 = inlined_call_operand.hbm [shape: f32[8,128], index: 5, kind: output, shape index: {1}]
  %6 = xla_tuple %s4, %s5
  %s7 = sld [smem:[#allocation0]]
  $region50: #{tpu_custom_call.1} parent=0
    _
  %s9 = ssub.s32 1, %s7
  %s10 = scalar_select 0, %s9, %s7
  $region1: #{tpu_custom_call.1} parent=0
    #allocation2 [shape = 'u8[4096]{0}', space=vmem, size = 0x1000, scoped, tag = 'input window, operand 0, single buffered']
    #allocation3 [shape = 's32[1]{0}', space=sflag, size = 0x4, scoped, tag = 'scoped memory for tpu_custom_call.1']
    #allocation4 [shape = 's32[1]{0}', space=sflag, size = 0x4, scoped, tag = 'scoped memory for tpu_custom_call.1']
    #allocation5 [shape = 'u8[4096]{0}', space=vmem, size = 0x1000, scoped, tag = 'input window, operand 1, single buffered']
    #allocation6 [shape = 's32[1]{0}', space=sflag, size = 0x4, scoped, tag = 'scoped memory for tpu_custom_call.1']
    #allocation7 [shape = 'u8[131072]{0}', space=vmem, size = 0x20000, scoped, tag = 'input window, operand 2, single buffered']
    #allocation8 [shape = 'u8[8192]{0}', space=vmem, size = 0x2000, scoped, tag = 'input window, operand 3, single buffered']
    #allocation9 [shape = 's32[1]{0}', space=sflag, size = 0x4, scoped, tag = 'scoped memory for tpu_custom_call.1']
    #allocation10 [shape = 'u8[4096]{0}', space=vmem, size = 0x1000, scoped, tag = 'output window, operand 0, single buffered']
    #allocation11 [shape = 'u8[4096]{0}', space=vmem, size = 0x1000, scoped, tag = 'output window, operand 1, single buffered']
    #allocation12 [shape = 's32[1]{0}', space=sflag, size = 0x4, scoped, tag = 'scoped memory for tpu_custom_call.1']
    %11 = vsyncpa [#allocation3], 0
    %12 = vsyncpa [#allocation6], 0
    %13 = vsyncpa [#allocation9], 0
    %14 = vsyncpa [#allocation4], 0
    %15 = vsyncpa [#allocation12], 0
    // Predicated region
    $region2: #{tpu_custom_call.1} parent=1 // pred_check
      _
    $region3: #{tpu_custom_call.1} parent=1 // pred_check_branch
      %17 = sbr.rel (0) target = $region5
    $region4: #{tpu_custom_call.1} parent=1 // pred_region
      %s19 = ssub.s32 128, 128
      %20 = vsyncadd [#allocation3], %s19
      %s22 = sshll.u32 [#allocation2], 4
      %s23 = int_to_ptr.vmem [resolvable:$true] %s22
      %25 = dma.hbm_to_vmem [thread:$0]  %s0, 128, %s23, [#allocation3]
    $region5: #{tpu_custom_call.1} parent=1 // pred_fallthru
      _
    // Predicated region
    $region6: #{tpu_custom_call.1} parent=1 // pred_check
      _
    $region7: #{tpu_custom_call.1} parent=1 // pred_check_branch
      %27 = sbr.rel (0) target = $region9
    $region8: #{tpu_custom_call.1} parent=1 // pred_region
      %s29 = ssub.s32 128, 128
      %30 = vsyncadd [#allocation6], %s29
      %s32 = sshll.u32 [#allocation5], 4
      %s33 = int_to_ptr.vmem [resolvable:$true] %s32
      %35 = dma.hbm_to_vmem [thread:$0]  %s1, 128, %s33, [#allocation6]
    $region9: #{tpu_custom_call.1} parent=1 // pred_fallthru
      _
    // Predicated region
    $region10: #{tpu_custom_call.1} parent=1 // pred_check
      _
    $region11: #{tpu_custom_call.1} parent=1 // pred_check_branch
      %37 = sbr.rel (0) target = $region13
    $region12: #{tpu_custom_call.1} parent=1 // pred_region
      %s39 = ssub.s32 4096, 4096
      %40 = vsyncadd [#allocation6], %s39
      %s41 = sshll.u32 [#allocation7], 4
      %s42 = int_to_ptr.vmem [resolvable:$true] %s41
      %47 = dma.hbm_to_vmem [thread:$0]  %s2, 4096, %s42, [#allocation6], 256, 256, 16
    $region13: #{tpu_custom_call.1} parent=1 // pred_fallthru
      _
    // Predicated region
    $region14: #{tpu_custom_call.1} parent=1 // pred_check
      _
    $region15: #{tpu_custom_call.1} parent=1 // pred_check_branch
      %49 = sbr.rel (0) target = $region17
    $region16: #{tpu_custom_call.1} parent=1 // pred_region
      %s51 = ssub.s32 256, 256
      %52 = vsyncadd [#allocation9], %s51
      %s54 = sshll.u32 [#allocation8], 4
      %s55 = int_to_ptr.vmem [resolvable:$true] %s54
      %57 = dma.hbm_to_vmem [thread:$0]  %s3, 256, %s55, [#allocation9]
    $region17: #{tpu_custom_call.1} parent=1 // pred_fallthru
      _
    // Predicated region
    $region18: #{tpu_custom_call.1} parent=1 // pred_check
      _
    $region19: #{tpu_custom_call.1} parent=1 // pred_check_branch
      %59 = sbr.rel (0) target = $region21
    $region20: #{tpu_custom_call.1} parent=1 // pred_region
      %60 = dma.done [#allocation3], 128
    $region21: #{tpu_custom_call.1} parent=1 // pred_fallthru
      _
    // Predicated region
    $region22: #{tpu_custom_call.1} parent=1 // pred_check
      _
    $region23: #{tpu_custom_call.1} parent=1 // pred_check_branch
      %62 = sbr.rel (0) target = $region25
    $region24: #{tpu_custom_call.1} parent=1 // pred_region
      %63 = dma.done [#allocation6], 128
    $region25: #{tpu_custom_call.1} parent=1 // pred_fallthru
      _
    // Predicated region
    $region26: #{tpu_custom_call.1} parent=1 // pred_check
      _
    $region27: #{tpu_custom_call.1} parent=1 // pred_check_branch
      %65 = sbr.rel (0) target = $region29
    $region28: #{tpu_custom_call.1} parent=1 // pred_region
      %66 = dma.done [#allocation6], 4096
    $region29: #{tpu_custom_call.1} parent=1 // pred_fallthru
      _
    // Predicated region
    $region30: #{tpu_custom_call.1} parent=1 // pred_check
      _
    $region31: #{tpu_custom_call.1} parent=1 // pred_check_branch
      %68 = sbr.rel (0) target = $region33
    $region32: #{tpu_custom_call.1} parent=1 // pred_region
      %69 = dma.done [#allocation9], 256
    $region33: #{tpu_custom_call.1} parent=1 // pred_fallthru
      _
    %v71 = vld [vmem:[#allocation2] sm:$0xff]
    %v72 = vld [vmem:[#allocation5] sm:$0xff]
    %v73 = vld [vmem:[#allocation7] sm:$0xff]
    %v74 = vld [vmem:[#allocation7 + $0x8] sm:$0xff]
    %v75 = vld [vmem:[#allocation7 + $0x10] sm:$0xff]
    %v76 = vld [vmem:[#allocation7 + $0x18] sm:$0xff]
    %v77 = vld [vmem:[#allocation7 + $0x20] sm:$0xff]
    %v78 = vld [vmem:[#allocation7 + $0x28] sm:$0xff]
    %v79 = vld [vmem:[#allocation7 + $0x30] sm:$0xff]
    %v80 = vld [vmem:[#allocation7 + $0x38] sm:$0xff]
    %v81 = vld [vmem:[#allocation7 + $0x40] sm:$0xff]
    %v82 = vld [vmem:[#allocation7 + $0x48] sm:$0xff]
    %v83 = vld [vmem:[#allocation7 + $0x50] sm:$0xff]
    %v84 = vld [vmem:[#allocation7 + $0x58] sm:$0xff]
    %v85 = vld [vmem:[#allocation7 + $0x60] sm:$0xff]
    %v86 = vld [vmem:[#allocation7 + $0x68] sm:$0xff]
    %v87 = vld [vmem:[#allocation7 + $0x70] sm:$0xff]
    %v88 = vld [vmem:[#allocation7 + $0x78] sm:$0xff]
    %v89 = vld [vmem:[#allocation7 + $0x80] sm:$0xff]
    %v90 = vld [vmem:[#allocation7 + $0x88] sm:$0xff]
    %v91 = vld [vmem:[#allocation7 + $0x90] sm:$0xff]
    %v92 = vld [vmem:[#allocation7 + $0x98] sm:$0xff]
    %v93 = vld [vmem:[#allocation7 + $0xa0] sm:$0xff]
    %v94 = vld [vmem:[#allocation7 + $0xa8] sm:$0xff]
    %v95 = vld [vmem:[#allocation7 + $0xb0] sm:$0xff]
    %v96 = vld [vmem:[#allocation7 + $0xb8] sm:$0xff]
    %v97 = vld [vmem:[#allocation7 + $0xc0] sm:$0xff]
    %v98 = vld [vmem:[#allocation7 + $0xc8] sm:$0xff]
    %v99 = vld [vmem:[#allocation7 + $0xd0] sm:$0xff]
    %v100 = vld [vmem:[#allocation7 + $0xd8] sm:$0xff]
    %v101 = vld [vmem:[#allocation7 + $0xe0] sm:$0xff]
    %v102 = vld [vmem:[#allocation7 + $0xe8] sm:$0xff]
    %v103 = vld [vmem:[#allocation7 + $0xf0] sm:$0xff]
    %v104 = vld [vmem:[#allocation7 + $0xf8] sm:$0xff]
    %v105 = vld [vmem:[#allocation8] sm:$0xff]
    %v106 = vld [vmem:[#allocation8 + $0x8] sm:$0xff]
    %v107 = vpack.c.bf16 %v71, %v71
    %v140 = vunpack.c.l.b16 %v73
    %v141 = vunpack.c.h.b16 %v73
    %v142 = vunpack.c.l.b16 %v74
    %v143 = vunpack.c.h.b16 %v74
    %v144 = vunpack.c.l.b16 %v75
    %v145 = vunpack.c.h.b16 %v75
    %v146 = vunpack.c.l.b16 %v76
    %v147 = vunpack.c.h.b16 %v76
    %v148 = vunpack.c.l.b16 %v77
    %v149 = vunpack.c.h.b16 %v77
    %v150 = vunpack.c.l.b16 %v78
    %v151 = vunpack.c.h.b16 %v78
    %v152 = vunpack.c.l.b16 %v79
    %v153 = vunpack.c.h.b16 %v79
    %v154 = vunpack.c.l.b16 %v80
    %v155 = vunpack.c.h.b16 %v80
    %v156 = vunpack.c.l.b16 %v81
    %v157 = vunpack.c.h.b16 %v81
    %v158 = vunpack.c.l.b16 %v82
    %v159 = vunpack.c.h.b16 %v82
    %v160 = vunpack.c.l.b16 %v83
    %v161 = vunpack.c.h.b16 %v83
    %v162 = vunpack.c.l.b16 %v84
    %v163 = vunpack.c.h.b16 %v84
    %v164 = vunpack.c.l.b16 %v85
    %v165 = vunpack.c.h.b16 %v85
    %v166 = vunpack.c.l.b16 %v86
    %v167 = vunpack.c.h.b16 %v86
    %v168 = vunpack.c.l.b16 %v87
    %v169 = vunpack.c.h.b16 %v87
    %v170 = vunpack.c.l.b16 %v88
    %v171 = vunpack.c.h.b16 %v88
    %v172 = vunpack.c.l.b16 %v89
    %v173 = vunpack.c.h.b16 %v89
    %v174 = vunpack.c.l.b16 %v90
    %v175 = vunpack.c.h.b16 %v90
    %v176 = vunpack.c.l.b16 %v91
    %v177 = vunpack.c.h.b16 %v91
    %v178 = vunpack.c.l.b16 %v92
    %v179 = vunpack.c.h.b16 %v92
    %v180 = vunpack.c.l.b16 %v93
    %v181 = vunpack.c.h.b16 %v93
    %v182 = vunpack.c.l.b16 %v94
    %v183 = vunpack.c.h.b16 %v94
    %v184 = vunpack.c.l.b16 %v95
    %v185 = vunpack.c.h.b16 %v95
    %v186 = vunpack.c.l.b16 %v96
    %v187 = vunpack.c.h.b16 %v96
    %v188 = vunpack.c.l.b16 %v97
    %v189 = vunpack.c.h.b16 %v97
    %v190 = vunpack.c.l.b16 %v98
    %v191 = vunpack.c.h.b16 %v98
    %v192 = vunpack.c.l.b16 %v99
    %v193 = vunpack.c.h.b16 %v99
    %v194 = vunpack.c.l.b16 %v100
    %v195 = vunpack.c.h.b16 %v100
    %v196 = vunpack.c.l.b16 %v101
    %v197 = vunpack.c.h.b16 %v101
    %v198 = vunpack.c.l.b16 %v102
    %v199 = vunpack.c.h.b16 %v102
    %v200 = vunpack.c.l.b16 %v103
    %v201 = vunpack.c.h.b16 %v103
    %v202 = vunpack.c.l.b16 %v104
    %v203 = vunpack.c.h.b16 %v104
    %v204 = vpack.c.b16 %v144, %v140
    %v205 = vpack.c.b16 %v145, %v141
    %v206 = vpack.c.b16 %v146, %v142
    %v207 = vpack.c.b16 %v147, %v143
    %v208 = vpack.c.b16 %v152, %v148
    %v209 = vpack.c.b16 %v153, %v149
    %v210 = vpack.c.b16 %v154, %v150
    %v211 = vpack.c.b16 %v155, %v151
    %v212 = vpack.c.b16 %v160, %v156
    %v213 = vpack.c.b16 %v161, %v157
    %v214 = vpack.c.b16 %v162, %v158
    %v215 = vpack.c.b16 %v163, %v159
    %v216 = vpack.c.b16 %v168, %v164
    %v217 = vpack.c.b16 %v169, %v165
    %v218 = vpack.c.b16 %v170, %v166
    %v219 = vpack.c.b16 %v171, %v167
    %v220 = vpack.c.b16 %v176, %v172
    %v221 = vpack.c.b16 %v177, %v173
    %v222 = vpack.c.b16 %v178, %v174
    %v223 = vpack.c.b16 %v179, %v175
    %v224 = vpack.c.b16 %v184, %v180
    %v225 = vpack.c.b16 %v185, %v181
    %v226 = vpack.c.b16 %v186, %v182
    %v227 = vpack.c.b16 %v187, %v183
    %v228 = vpack.c.b16 %v192, %v188
    %v229 = vpack.c.b16 %v193, %v189
    %v230 = vpack.c.b16 %v194, %v190
    %v231 = vpack.c.b16 %v195, %v191
    %v232 = vpack.c.b16 %v200, %v196
    %v233 = vpack.c.b16 %v201, %v197
    %v234 = vpack.c.b16 %v202, %v198
    %v235 = vpack.c.b16 %v203, %v199
    %268 = vmatprep.subr.bf16.mxu0 %v205
    %269 = vmatpush1.bf16.msra.mxu0 %v204
    %270 = vmatprep.subr.bf16.mxu0 %v209
    %271 = vmatpush1.bf16.msra.mxu0 %v208
    %272 = vmatprep.subr.bf16.mxu0 %v213
    %273 = vmatpush1.bf16.msra.mxu0 %v212
    %274 = vmatprep.subr.bf16.mxu0 %v217
    %275 = vmatpush1.bf16.msra.mxu0 %v216
    %276 = vmatprep.subr.bf16.mxu0 %v221
    %277 = vmatpush1.bf16.msra.mxu0 %v220
    %278 = vmatprep.subr.bf16.mxu0 %v225
    %279 = vmatpush1.bf16.msra.mxu0 %v224
    %280 = vmatprep.subr.bf16.mxu0 %v229
    %281 = vmatpush1.bf16.msra.mxu0 %v228
    %282 = vmatprep.subr.bf16.mxu0 %v233
    %283 = vmatpush1.bf16.msra.mxu0 %v232
    %284 = vmatprep.subr.bf16.mxu0 0
    %285 = vmatpush1.bf16.msra.mxu0 0
    %286 = vmatprep.subr.bf16.mxu0 0
    %287 = vmatpush1.bf16.msra.mxu0 0
    %288 = vmatprep.subr.bf16.mxu0 0
    %289 = vmatpush1.bf16.msra.mxu0 0
    %290 = vmatprep.subr.bf16.mxu0 0
    %291 = vmatpush1.bf16.msra.mxu0 0
    %292 = vmatprep.subr.bf16.mxu0 0
    %293 = vmatpush1.bf16.msra.mxu0 0
    %294 = vmatprep.subr.bf16.mxu0 0
    %295 = vmatpush1.bf16.msra.mxu0 0
    %296 = vmatprep.subr.bf16.mxu0 0
    %297 = vmatpush1.bf16.msra.mxu0 0
    %298 = vmatprep.subr.bf16.mxu0 0
    %299 = vmatpush1.bf16.msra.mxu0 0
    %300 = vmatprep.mubr.bf16.mxu0 0
    %301 = vmatmul.mubr.bf16.gmra.mrb[0].mxu0 %v107
    %v302 = vpop.f32.mrb[0].mxu0
    %v303 = vadd.f32 0.0, %v302
    %v304 = vpop.f32.mrb[0].mxu0
    %v305 = vadd.f32 0.0, %v304
    %v306 = vpop.f32.mrb[0].mxu0
    %v307 = vpop.f32.mrb[0].mxu0
    %308 = vdwg.mxu0
    %309 = vmatprep.subr.bf16.mxu0 %v207
    %310 = vmatpush1.bf16.msra.mxu0 %v206
    %311 = vmatprep.subr.bf16.mxu0 %v211
    %312 = vmatpush1.bf16.msra.mxu0 %v210
    %313 = vmatprep.subr.bf16.mxu0 %v215
    %314 = vmatpush1.bf16.msra.mxu0 %v214
    %315 = vmatprep.subr.bf16.mxu0 %v219
    %316 = vmatpush1.bf16.msra.mxu0 %v218
    %317 = vmatprep.subr.bf16.mxu0 %v223
    %318 = vmatpush1.bf16.msra.mxu0 %v222
    %319 = vmatprep.subr.bf16.mxu0 %v227
    %320 = vmatpush1.bf16.msra.mxu0 %v226
    %321 = vmatprep.subr.bf16.mxu0 %v231
    %322 = vmatpush1.bf16.msra.mxu0 %v230
    %323 = vmatprep.subr.bf16.mxu0 %v235
    %324 = vmatpush1.bf16.msra.mxu0 %v234
    %325 = vmatprep.subr.bf16.mxu0 0
    %326 = vmatpush1.bf16.msra.mxu0 0
    %327 = vmatprep.subr.bf16.mxu0 0
    %328 = vmatpush1.bf16.msra.mxu0 0
    %329 = vmatprep.subr.bf16.mxu0 0
    %330 = vmatpush1.bf16.msra.mxu0 0
    %331 = vmatprep.subr.bf16.mxu0 0
    %332 = vmatpush1.bf16.msra.mxu0 0
    %333 = vmatprep.subr.bf16.mxu0 0
    %334 = vmatpush1.bf16.msra.mxu0 0
    %335 = vmatprep.subr.bf16.mxu0 0
    %336 = vmatpush1.bf16.msra.mxu0 0
    %337 = vmatprep.subr.bf16.mxu0 0
    %338 = vmatpush1.bf16.msra.mxu0 0
    %339 = vmatprep.subr.bf16.mxu0 0
    %340 = vmatpush1.bf16.msra.mxu0 0
    %341 = vmatprep.mubr.bf16.mxu0 0
    %342 = vmatmul.mubr.bf16.gmra.mrb[0].mxu0 %v107
    %v343 = vpop.f32.mrb[0].mxu0
    %v344 = vadd.f32 0.0, %v343
    %v345 = vpop.f32.mrb[0].mxu0
    %v346 = vadd.f32 0.0, %v345
    %v347 = vpop.f32.mrb[0].mxu0
    %v348 = vpop.f32.mrb[0].mxu0
    %349 = vdwg.mxu0
    %v350 = vpack.c.bf16 %v72, %v72
    %351 = vmatprep.subr.bf16.mxu0 %v205
    %352 = vmatpush1.bf16.msra.mxu0 %v204
    %353 = vmatprep.subr.bf16.mxu0 %v209
    %354 = vmatpush1.bf16.msra.mxu0 %v208
    %355 = vmatprep.subr.bf16.mxu0 %v213
    %356 = vmatpush1.bf16.msra.mxu0 %v212
    %357 = vmatprep.subr.bf16.mxu0 %v217
    %358 = vmatpush1.bf16.msra.mxu0 %v216
    %359 = vmatprep.subr.bf16.mxu0 %v221
    %360 = vmatpush1.bf16.msra.mxu0 %v220
    %361 = vmatprep.subr.bf16.mxu0 %v225
    %362 = vmatpush1.bf16.msra.mxu0 %v224
    %363 = vmatprep.subr.bf16.mxu0 %v229
    %364 = vmatpush1.bf16.msra.mxu0 %v228
    %365 = vmatprep.subr.bf16.mxu0 %v233
    %366 = vmatpush1.bf16.msra.mxu0 %v232
    %367 = vmatprep.subr.bf16.mxu0 0
    %368 = vmatpush1.bf16.msra.mxu0 0
    %369 = vmatprep.subr.bf16.mxu0 0
    %370 = vmatpush1.bf16.msra.mxu0 0
    %371 = vmatprep.subr.bf16.mxu0 0
    %372 = vmatpush1.bf16.msra.mxu0 0
    %373 = vmatprep.subr.bf16.mxu0 0
    %374 = vmatpush1.bf16.msra.mxu0 0
    %375 = vmatprep.subr.bf16.mxu0 0
    %376 = vmatpush1.bf16.msra.mxu0 0
    %377 = vmatprep.subr.bf16.mxu0 0
    %378 = vmatpush1.bf16.msra.mxu0 0
    %379 = vmatprep.subr.bf16.mxu0 0
    %380 = vmatpush1.bf16.msra.mxu0 0
    %381 = vmatprep.subr.bf16.mxu0 0
    %382 = vmatpush1.bf16.msra.mxu0 0
    %383 = vmatprep.mubr.bf16.mxu0 0
    %384 = vmatmul.mubr.bf16.gmra.mrb[0].mxu0 %v350
    %v385 = vpop.f32.mrb[0].mxu0
    %v386 = vadd.f32 0.0, %v385
    %v387 = vpop.f32.mrb[0].mxu0
    %v388 = vadd.f32 0.0, %v387
    %v389 = vpop.f32.mrb[0].mxu0
    %v390 = vpop.f32.mrb[0].mxu0
    %391 = vdwg.mxu0
    %392 = vmatprep.subr.bf16.mxu0 %v207
    %393 = vmatpush1.bf16.msra.mxu0 %v206
    %394 = vmatprep.subr.bf16.mxu0 %v211
    %395 = vmatpush1.bf16.msra.mxu0 %v210
    %396 = vmatprep.subr.bf16.mxu0 %v215
    %397 = vmatpush1.bf16.msra.mxu0 %v214
    %398 = vmatprep.subr.bf16.mxu0 %v219
    %399 = vmatpush1.bf16.msra.mxu0 %v218
    %400 = vmatprep.subr.bf16.mxu0 %v223
    %401 = vmatpush1.bf16.msra.mxu0 %v222
    %402 = vmatprep.subr.bf16.mxu0 %v227
    %403 = vmatpush1.bf16.msra.mxu0 %v226
    %404 = vmatprep.subr.bf16.mxu0 %v231
    %405 = vmatpush1.bf16.msra.mxu0 %v230
    %406 = vmatprep.subr.bf16.mxu0 %v235
    %407 = vmatpush1.bf16.msra.mxu0 %v234
    %408 = vmatprep.subr.bf16.mxu0 0
    %409 = vmatpush1.bf16.msra.mxu0 0
    %410 = vmatprep.subr.bf16.mxu0 0
    %411 = vmatpush1.bf16.msra.mxu0 0
    %412 = vmatprep.subr.bf16.mxu0 0
    %413 = vmatpush1.bf16.msra.mxu0 0
    %414 = vmatprep.subr.bf16.mxu0 0
    %415 = vmatpush1.bf16.msra.mxu0 0
    %416 = vmatprep.subr.bf16.mxu0 0
    %417 = vmatpush1.bf16.msra.mxu0 0
    %418 = vmatprep.subr.bf16.mxu0 0
    %419 = vmatpush1.bf16.msra.mxu0 0
    %420 = vmatprep.subr.bf16.mxu0 0
    %421 = vmatpush1.bf16.msra.mxu0 0
    %422 = vmatprep.subr.bf16.mxu0 0
    %423 = vmatpush1.bf16.msra.mxu0 0
    %424 = vmatprep.mubr.bf16.mxu0 0
    %425 = vmatmul.mubr.bf16.gmra.mrb[0].mxu0 %v350
    %v426 = vpop.f32.mrb[0].mxu0
    %v427 = vadd.f32 0.0, %v426
    %v428 = vpop.f32.mrb[0].mxu0
    %v429 = vadd.f32 0.0, %v428
    %v430 = vpop.f32.mrb[0].mxu0
    %v431 = vpop.f32.mrb[0].mxu0
    %432 = vdwg.mxu0
    %v433 = vadd.f32 %v303, %v427
    %v434 = vadd.f32 %v305, %v429
    %v435 = vlaneseq
    %v436 = vshrl.u32 %v435, 7
    %v437 = vsub.s32 0, %v436
    %v438 = vrot.slane %v105, %v437
    %v439 = vlaneseq
    %v440 = vshrl.u32 %v439, 7
    %v441 = vsub.s32 0, %v440
    %v442 = vrot.slane %v106, %v441
    %v443 = vadd.f32 %v433, %v438
    %v444 = vadd.f32 %v434, %v442
    %v445 = vrot.slane %v443, 4
    %v446 = vadd.f32 %v443, %v445
    %v447 = vrot.slane %v446, 2
    %v448 = vadd.f32 %v446, %v447
    %v449 = vrot.slane %v448, 1
    %v450 = vadd.f32 %v448, %v449
    %v451 = vrot.slane %v444, 4
    %v452 = vadd.f32 %v444, %v451
    %v453 = vrot.slane %v452, 2
    %v454 = vadd.f32 %v452, %v453
    %v455 = vrot.slane %v454, 1
    %v456 = vadd.f32 %v454, %v455
    %v457 = vrcp.pop 8.0
    %v458 = vmul.f32 %v450, %v457
    %v459 = vmul.f32 %v456, %v457
    %v460 = vsub.f32 %v443, %v458
    %v461 = vsub.f32 %v444, %v459
    %v462 = vmul.f32 %v460, %v460
    %v463 = vmul.f32 %v461, %v461
    %v464 = vrot.slane %v462, 4
    %v465 = vadd.f32 %v462, %v464
    %v466 = vrot.slane %v465, 2
    %v467 = vadd.f32 %v465, %v466
    %v468 = vrot.slane %v467, 1
    %v469 = vadd.f32 %v467, %v468
    %v470 = vrot.slane %v463, 4
    %v471 = vadd.f32 %v463, %v470
    %v472 = vrot.slane %v471, 2
    %v473 = vadd.f32 %v471, %v472
    %v474 = vrot.slane %v473, 1
    %v475 = vadd.f32 %v473, %v474
    %v476 = vmul.f32 %v469, %v457
    %v477 = vmul.f32 %v475, %v457
    %v478 = vadd.f32 %v476, 1e-05
    %v479 = vadd.f32 %v477, 1e-05
    %v480 = vrsqrt.pop %v478
    %v481 = vrsqrt.pop %v479
    %v482 = vmul.f32 %v460, %v480
    %v483 = vmul.f32 %v461, %v481
    %v484 = vlaneseq
    %v485 = vshrl.u32 %v484, 7
    %v486 = vsub.s32 1, %v485
    %v487 = vrot.slane %v105, %v486
    %v488 = vlaneseq
    %v489 = vshrl.u32 %v488, 7
    %v490 = vsub.s32 1, %v489
    %v491 = vrot.slane %v106, %v490
    %v492 = vmul.f32 %v482, %v487
    %v493 = vmul.f32 %v483, %v491
    %v494 = vlaneseq
    %v495 = vshrl.u32 %v494, 7
    %v496 = vsub.s32 2, %v495
    %v497 = vrot.slane %v105, %v496
    %v498 = vlaneseq
    %v499 = vshrl.u32 %v498, 7
    %v500 = vsub.s32 2, %v499
    %v501 = vrot.slane %v106, %v500
    %v502 = vadd.f32 %v492, %v497
    %v503 = vadd.f32 %v493, %v501
    %v504 = vxor.u32 %v502, 2147483648
    %v505 = vmul.f32 %v504, 1.442695
    %v506 = vpow.pop %v505
    %v507 = vadd.f32 %v506, 1.0
    %v508 = vrcp.pop %v507
    %v509 = vmul.f32 1.0, %v508
    %vm510 = vcmp.gt.f32.partialorder %v503, 20.0
    %v511 = vmin.f32 %v503, 20.0
    %v512 = vmul.f32 %v511, 1.442695
    %v513 = vpow.pop %v512
    %v514 = vadd.f32 %v513, 1.0
    %v515 = vlog2.pop %v514
    %v516 = vmul.f32 %v515, 0.6931472
    %v517 = vmul.f32 -0.5, %v513
    %v518 = vadd.f32 %v517, 1.0
    %v519 = vmul.f32 %v518, %v513
    %v520 = vand.u32 2147483647, %v513
    %vm521 = vcmp.lt.f32.partialorder %v520, 0.0004427343
    %v522 = vsel %vm521, %v519, %v516
    %v523 = vsel %vm510, %v503, %v522
    %v524 = vmul.f32 %v509, %v523
    %v525 = vrot.slane %v524, 4
    %v526 = vadd.f32 %v524, %v525
    %v527 = vrot.slane %v526, 2
    %v528 = vadd.f32 %v526, %v527
    %v529 = vrot.slane %v528, 1
    %v530 = vadd.f32 %v528, %v529
    %v531 = vmul.f32 %v530, %v457
    %v532 = vsub.f32 %v524, %v531
    %v533 = vmul.f32 %v532, %v532
    %v534 = vrot.slane %v533, 4
    %v535 = vadd.f32 %v533, %v534
    %v536 = vrot.slane %v535, 2
    %v537 = vadd.f32 %v535, %v536
    %v538 = vrot.slane %v537, 1
    %v539 = vadd.f32 %v537, %v538
    %v540 = vmul.f32 %v539, %v457
    %v541 = vadd.f32 %v540, 1e-05
    %v542 = vrsqrt.pop %v541
    %v543 = vmul.f32 %v532, %v542
    %v544 = vlaneseq
    %v545 = vshrl.u32 %v544, 7
    %v546 = vsub.s32 3, %v545
    %v547 = vrot.slane %v105, %v546
    %v548 = vmul.f32 %v543, %v547
    %v549 = vlaneseq
    %v550 = vshrl.u32 %v549, 7
    %v551 = vsub.s32 4, %v550
    %v552 = vrot.slane %v105, %v551
    %v553 = vadd.f32 %v548, %v552
    %v554 = vadd.f32 %v71, %v553
    %vm555 = vcmp.gt.f32.partialorder %v554, 20.0
    %v556 = vmin.f32 %v554, 20.0
    %v557 = vmul.f32 %v556, 1.442695
    %v558 = vpow.pop %v557
    %v559 = vadd.f32 %v558, 1.0
    %v560 = vlog2.pop %v559
    %v561 = vmul.f32 %v560, 0.6931472
    %v562 = vmul.f32 -0.5, %v558
    %v563 = vadd.f32 %v562, 1.0
    %v564 = vmul.f32 %v563, %v558
    %v565 = vand.u32 2147483647, %v558
    %vm566 = vcmp.lt.f32.partialorder %v565, 0.0004427343
    %v567 = vsel %vm566, %v564, %v561
    %v568 = vsel %vm555, %v554, %v567
    %569 = vst [vmem:[#allocation10] sm:$0xff] %v568
    %v570 = vadd.f32 %v386, %v344
    %v571 = vadd.f32 %v388, %v346
    %v572 = vadd.f32 %v570, %v438
    %v573 = vadd.f32 %v571, %v442
    %v574 = vrot.slane %v572, 4
    %v575 = vadd.f32 %v572, %v574
    %v576 = vrot.slane %v575, 2
    %v577 = vadd.f32 %v575, %v576
    %v578 = vrot.slane %v577, 1
    %v579 = vadd.f32 %v577, %v578
    %v580 = vrot.slane %v573, 4
    %v581 = vadd.f32 %v573, %v580
    %v582 = vrot.slane %v581, 2
    %v583 = vadd.f32 %v581, %v582
    %v584 = vrot.slane %v583, 1
    %v585 = vadd.f32 %v583, %v584
    %v586 = vmul.f32 %v579, %v457
    %v587 = vmul.f32 %v585, %v457
    %v588 = vsub.f32 %v572, %v586
    %v589 = vsub.f32 %v573, %v587
    %v590 = vmul.f32 %v588, %v588
    %v591 = vmul.f32 %v589, %v589
    %v592 = vrot.slane %v590, 4
    %v593 = vadd.f32 %v590, %v592
    %v594 = vrot.slane %v593, 2
    %v595 = vadd.f32 %v593, %v594
    %v596 = vrot.slane %v595, 1
    %v597 = vadd.f32 %v595, %v596
    %v598 = vrot.slane %v591, 4
    %v599 = vadd.f32 %v591, %v598
    %v600 = vrot.slane %v599, 2
    %v601 = vadd.f32 %v599, %v600
    %v602 = vrot.slane %v601, 1
    %v603 = vadd.f32 %v601, %v602
    %v604 = vmul.f32 %v597, %v457
    %v605 = vmul.f32 %v603, %v457
    %v606 = vadd.f32 %v604, 1e-05
    %v607 = vadd.f32 %v605, 1e-05
    %v608 = vrsqrt.pop %v606
    %v609 = vrsqrt.pop %v607
    %v610 = vmul.f32 %v588, %v608
    %v611 = vmul.f32 %v589, %v609
    %v612 = vmul.f32 %v610, %v487
    %v613 = vmul.f32 %v611, %v491
    %v614 = vadd.f32 %v612, %v497
    %v615 = vadd.f32 %v613, %v501
    %v616 = vxor.u32 %v614, 2147483648
    %v617 = vmul.f32 %v616, 1.442695
    %v618 = vpow.pop %v617
    %v619 = vadd.f32 %v618, 1.0
    %v620 = vrcp.pop %v619
    %v621 = vmul.f32 1.0, %v620
    %vm622 = vcmp.gt.f32.partialorder %v615, 20.0
    %v623 = vmin.f32 %v615, 20.0
    %v624 = vmul.f32 %v623, 1.442695
    %v625 = vpow.pop %v624
    %v626 = vadd.f32 %v625, 1.0
    %v627 = vlog2.pop %v626
    %v628 = vmul.f32 %v627, 0.6931472
    %v629 = vmul.f32 -0.5, %v625
    %v630 = vadd.f32 %v629, 1.0
    %v631 = vmul.f32 %v630, %v625
    %v632 = vand.u32 2147483647, %v625
    %vm633 = vcmp.lt.f32.partialorder %v632, 0.0004427343
    %v634 = vsel %vm633, %v631, %v628
    %v635 = vsel %vm622, %v615, %v634
    %v636 = vmul.f32 %v621, %v635
    %v637 = vrot.slane %v636, 4
    %v638 = vadd.f32 %v636, %v637
    %v639 = vrot.slane %v638, 2
    %v640 = vadd.f32 %v638, %v639
    %v641 = vrot.slane %v640, 1
    %v642 = vadd.f32 %v640, %v641
    %v643 = vmul.f32 %v642, %v457
    %v644 = vsub.f32 %v636, %v643
    %v645 = vmul.f32 %v644, %v644
    %v646 = vrot.slane %v645, 4
    %v647 = vadd.f32 %v645, %v646
    %v648 = vrot.slane %v647, 2
    %v649 = vadd.f32 %v647, %v648
    %v650 = vrot.slane %v649, 1
    %v651 = vadd.f32 %v649, %v650
    %v652 = vmul.f32 %v651, %v457
    %v653 = vadd.f32 %v652, 1e-05
    %v654 = vrsqrt.pop %v653
    %v655 = vmul.f32 %v644, %v654
    %v656 = vmul.f32 %v655, %v547
    %v657 = vadd.f32 %v656, %v552
    %v658 = vadd.f32 %v72, %v657
    %vm659 = vcmp.gt.f32.partialorder %v658, 20.0
    %v660 = vmin.f32 %v658, 20.0
    %v661 = vmul.f32 %v660, 1.442695
    %v662 = vpow.pop %v661
    %v663 = vadd.f32 %v662, 1.0
    %v664 = vlog2.pop %v663
    %v665 = vmul.f32 %v664, 0.6931472
    %v666 = vmul.f32 -0.5, %v662
    %v667 = vadd.f32 %v666, 1.0
    %v668 = vmul.f32 %v667, %v662
    %v669 = vand.u32 2147483647, %v662
    %vm670 = vcmp.lt.f32.partialorder %v669, 0.0004427343
    %v671 = vsel %vm670, %v668, %v665
    %v672 = vsel %vm659, %v658, %v671
    %673 = vst [vmem:[#allocation11] sm:$0xff] %v672
    // Predicated region
    $region34: #{tpu_custom_call.1} parent=1 // pred_check
      _
    $region35: #{tpu_custom_call.1} parent=1 // pred_check_branch
      %675 = sbr.rel (0) target = $region37
    $region36: #{tpu_custom_call.1} parent=1 // pred_region
      %s677 = ssub.s32 128, 128
      %678 = vsyncadd [#allocation4], %s677
      %s680 = sshll.u32 [#allocation10], 4
      %s681 = int_to_ptr.vmem [resolvable:$true] %s680
      %683 = dma.vmem_to_hbm [thread:$0]  %s681, 128, %s4, [#allocation4]
    $region37: #{tpu_custom_call.1} parent=1 // pred_fallthru
      _
    // Predicated region
    $region38: #{tpu_custom_call.1} parent=1 // pred_check
      _
    $region39: #{tpu_custom_call.1} parent=1 // pred_check_branch
      %685 = sbr.rel (0) target = $region41
    $region40: #{tpu_custom_call.1} parent=1 // pred_region
      %s687 = ssub.s32 128, 128
      %688 = vsyncadd [#allocation12], %s687
      %s690 = sshll.u32 [#allocation11], 4
      %s691 = int_to_ptr.vmem [resolvable:$true] %s690
      %693 = dma.vmem_to_hbm [thread:$0]  %s691, 128, %s5, [#allocation12]
    $region41: #{tpu_custom_call.1} parent=1 // pred_fallthru
      _
    // Predicated region
    $region42: #{tpu_custom_call.1} parent=1 // pred_check
      _
    $region43: #{tpu_custom_call.1} parent=1 // pred_check_branch
      %695 = sbr.rel (0) target = $region45
    $region44: #{tpu_custom_call.1} parent=1 // pred_region
      %696 = dma.done [#allocation4], 128
    $region45: #{tpu_custom_call.1} parent=1 // pred_fallthru
      _
    // Predicated region
    $region46: #{tpu_custom_call.1} parent=1 // pred_check
      _
    $region47: #{tpu_custom_call.1} parent=1 // pred_check_branch
      %698 = sbr.rel (0) target = $region49
    $region48: #{tpu_custom_call.1} parent=1 // pred_region
      %699 = dma.done [#allocation12], 128
    $region49: #{tpu_custom_call.1} parent=1 // pred_fallthru
      _
    %700 = vsyncpa [#allocation3], 1
    %701 = vsyncpa [#allocation6], 1
    %702 = vsyncpa [#allocation9], 1
    %703 = vsyncpa [#allocation4], 1
    %704 = vsyncpa [#allocation12], 1

</llo_original>
